<compile_context>
chip_gen: v7x
topology: tpu7x:2x2x1
jax: 0.10.0
libtpu: 0.0.40
codegen_flags: <defaults>
</compile_context>

<pallas_src>
import jax
import jax.numpy as jnp
from jax.experimental import pallas as pl
from jax.experimental.pallas import tpu as pltpu


def _round_up(x, m):
    return ((x + m - 1) // m) * m


def make_bigru_kernel(L, H, out_pad):
    """Fused bidirectional single-layer GRU; emits final fwd|bwd hidden state."""

    def kernel(x_ref, wih_ref, bi_ref, whh_ref, bh_ref, out_ref, xp_ref):
        # x_ref  : (L, TN, D)   time-major batch tile of input features
        # wih_ref: (D, 6H)      [W_ih_fwd^T | W_ih_bwd^T] for gates (r,z,n)
        # bi_ref : (1, 6H)
        # whh_ref: (2H, 6H)     block-diag([W_hh_fwd^T, W_hh_bwd^T])
        # bh_ref : (1, 6H)
        # out_ref: (TN, out_pad)
        # xp_ref : (L, TN, 6H)  VMEM scratch holding the input projections
        tn = x_ref.shape[1]

        # (1) One fat MXU matmul: all time steps, both directions, all gates.
        xp_ref[...] = (
            jnp.einsum(
                "lnd,dg->lng",
                x_ref[...],
                wih_ref[...],
                preferred_element_type=jnp.float32,
            )
            + bi_ref[...]
        )

        whh = whh_ref[...]  # (2H, 6H)
        bh = bh_ref[...]    # (1, 6H)

        def step(t, h):
            # h = [h_fwd | h_bwd]  shape (TN, 2H)
            gx_f = xp_ref[t]            # forward reads x_t      (cols 0:3H)
            gx_b = xp_ref[L - 1 - t]    # backward reads x_{L-1-t} (cols 3H:6H)

            # (2) Single fused recurrent matmul for both directions / 3 gates.
            hp = jnp.dot(h, whh, preferred_element_type=jnp.float32) + bh

            hf = h[:, :H]
            hb = h[:, H:]

            # forward direction (PyTorch GRU equations, gate order r, z, n)
            rf = jax.nn.sigmoid(gx_f[:, 0 * H:1 * H] + hp[:, 0 * H:1 * H])
            zf = jax.nn.sigmoid(gx_f[:, 1 * H:2 * H] + hp[:, 1 * H:2 * H])
            nf = jnp.tanh(gx_f[:, 2 * H:3 * H] + rf * hp[:, 2 * H:3 * H])
            hf_new = (1.0 - zf) * nf + zf * hf

            # backward direction
            rb = jax.nn.sigmoid(gx_b[:, 3 * H:4 * H] + hp[:, 3 * H:4 * H])
            zb = jax.nn.sigmoid(gx_b[:, 4 * H:5 * H] + hp[:, 4 * H:5 * H])
            nb = jnp.tanh(gx_b[:, 5 * H:6 * H] + rb * hp[:, 5 * H:6 * H])
            hb_new = (1.0 - zb) * nb + zb * hb

            return jnp.concatenate([hf_new, hb_new], axis=1)

        h_final = jax.lax.fori_loop(
            0, L, step, jnp.zeros((tn, 2 * H), jnp.float32))

        # (3) Lane-dense output store: pad to a multiple of 128 lanes so the
        #     final store is a full (unmasked) vst; the wrapper slices it back.
        pad = out_pad - 2 * H
        if pad:
            h_final = jnp.concatenate(
                [h_final, jnp.zeros((tn, pad), jnp.float32)], axis=1)
        out_ref[...] = h_final

    return kernel


def rnn_context_encoder_forward(inputs, lens, params, hidden_size, *, tile_n=8):
    """inputs: (N, L, D) float32 features.  Returns utt_embedded (N, 2*H).

    Matches RnnContextEncoder.forward(inputs, lens) with bidirection=True,
    use_attn=False, alias=False, init_state=None, eval mode.  `lens` is unused
    on this path (kept for signature fidelity).
    """
    del lens  # unused when variable_lengths=False and alias=False
    N, L, D = inputs.shape
    H = hidden_size

    # Fold both directions / all gates into fat, lane-dense weight matrices.
    wih = jnp.concatenate([params["w_ih_f"].T, params["w_ih_b"].T], axis=1)  # (D,6H)
    bi = jnp.concatenate([params["b_ih_f"], params["b_ih_b"]])[None, :]      # (1,6H)
    whh = jnp.zeros((2 * H, 6 * H), jnp.float32)
    whh = whh.at[:H, :3 * H].set(params["w_hh_f"].T)
    whh = whh.at[H:, 3 * H:].set(params["w_hh_b"].T)                         # (2H,6H)
    bh = jnp.concatenate([params["b_hh_f"], params["b_hh_b"]])[None, :]      # (1,6H)

    # Sublane-aligned batch tile; pad the batch, slice back after the call.
    tile_n = max(8, min(tile_n, 128))
    n_pad = _round_up(max(N, tile_n), tile_n)
    x = jnp.transpose(inputs.astype(jnp.float32), (1, 0, 2))   # (L, N, D)
    if n_pad != N:
        x = jnp.pad(x, ((0, 0), (0, n_pad - N), (0, 0)))

    out_pad = _round_up(2 * H, 128)
    grid = (n_pad // tile_n,)

    kernel = make_bigru_kernel(L, H, out_pad)

    flops = (2 * L * n_pad * D * 6 * H            # input projections
             + L * 2 * n_pad * 2 * H * 6 * H)     # recurrent projections
    bytes_accessed = 4 * (L * n_pad * D + D * 6 * H + 2 * H * 6 * H
                          + 2 * 6 * H + n_pad * out_pad)
    cost = pl.CostEstimate(flops=flops,
                           transcendentals=L * n_pad * 6 * H,
                           bytes_accessed=bytes_accessed)

    out = pl.pallas_call(
        kernel,
        out_shape=jax.ShapeDtypeStruct((n_pad, out_pad), jnp.float32),
        grid_spec=pltpu.PrefetchScalarGridSpec(
            num_scalar_prefetch=0,
            grid=grid,
            in_specs=[
                pl.BlockSpec((L, tile_n, D), lambda i: (0, i, 0)),
                pl.BlockSpec((D, 6 * H), lambda i: (0, 0)),
                pl.BlockSpec((1, 6 * H), lambda i: (0, 0)),
                pl.BlockSpec((2 * H, 6 * H), lambda i: (0, 0)),
                pl.BlockSpec((1, 6 * H), lambda i: (0, 0)),
            ],
            out_specs=pl.BlockSpec((tile_n, out_pad), lambda i: (i, 0)),
            scratch_shapes=[pltpu.VMEM((L, tile_n, 6 * H), jnp.float32)],
        ),
        compiler_params=pltpu.CompilerParams(
            dimension_semantics=("parallel",)),
        cost_estimate=cost,
    )(x, wih, bi, whh, bh)

    return out[:N, :2 * H]


def reference_forward(inputs, params, hidden_size):
    """Pure-JAX bidirectional GRU matching the PyTorch forward (eval mode)."""
    H = hidden_size
    x = jnp.transpose(inputs.astype(jnp.float32), (1, 0, 2))  # (L, N, D)

    def run_dir(xs, w_ih, w_hh, b_ih, b_hh):
        n = xs.shape[1]

        def step(h, x_t):
            gi = x_t @ w_ih.T + b_ih
            gh = h @ w_hh.T + b_hh
            r = jax.nn.sigmoid(gi[:, :H] + gh[:, :H])
            z = jax.nn.sigmoid(gi[:, H:2 * H] + gh[:, H:2 * H])
            nn_ = jnp.tanh(gi[:, 2 * H:] + r * gh[:, 2 * H:])
            h_new = (1.0 - z) * nn_ + z * h
            return h_new, None

        h_last, _ = jax.lax.scan(step, jnp.zeros((n, H), jnp.float32), xs)
        return h_last

    h_f = run_dir(x, params["w_ih_f"], params["w_hh_f"],
                  params["b_ih_f"], params["b_hh_f"])
    h_b = run_dir(x[::-1], params["w_ih_b"], params["w_hh_b"],
                  params["b_ih_b"], params["b_hh_b"])
    return jnp.concatenate([h_f, h_b], axis=1)


if __name__ == "__main__":
    # Small config consistent with the module:
    N = 2            # batch
    L = 16           # seq_len
    D = 32           # context_cell_size (input feature / embedding size)
    H = 32           # hidden_size
    # bidirection=True -> output_size = 2*H = 64

    key = jax.random.PRNGKey(0)
    ks = jax.random.split(key, 9)

    params = {
        "w_ih_f": 0.1 * jax.random.normal(ks[0], (3 * H, D), jnp.float32),
        "w_hh_f": 0.1 * jax.random.normal(ks[1], (3 * H, H), jnp.float32),
        "b_ih_f": 0.1 * jax.random.normal(ks[2], (3 * H,), jnp.float32),
        "b_hh_f": 0.1 * jax.random.normal(ks[3], (3 * H,), jnp.float32),
        "w_ih_b": 0.1 * jax.random.normal(ks[4], (3 * H, D), jnp.float32),
        "w_hh_b": 0.1 * jax.random.normal(ks[5], (3 * H, H), jnp.float32),
        "b_ih_b": 0.1 * jax.random.normal(ks[6], (3 * H,), jnp.float32),
        "b_hh_b": 0.1 * jax.random.normal(ks[7], (3 * H,), jnp.float32),
    }

    inputs = jax.random.normal(ks[8], (N, L, D), jnp.float32)
    lens = jnp.full((N,), L, jnp.int32)   # unused on the default path

    utt = rnn_context_encoder_forward(inputs, lens, params, H)
    utt = jax.block_until_ready(utt)

    ref = jax.block_until_ready(reference_forward(inputs, params, H))

    assert utt.shape == (N, 2 * H)
    assert jnp.allclose(utt, ref, atol=1e-4, rtol=1e-4)

    print("KERNEL_OK")
</pallas_src>

<mosaic_0001>
module attributes {stable_mosaic.version = 11 : i64} {
  func.func @kernel(%arg0: i32, %arg1: memref<16x8x32xf32, #tpu.memory_space<vmem>>, %arg2: memref<32x192xf32, #tpu.memory_space<vmem>>, %arg3: memref<1x192xf32, #tpu.memory_space<vmem>>, %arg4: memref<64x192xf32, #tpu.memory_space<vmem>>, %arg5: memref<1x192xf32, #tpu.memory_space<vmem>>, %arg6: memref<8x128xf32, #tpu.memory_space<vmem>>, %arg7: memref<16x8x192xf32, #tpu.memory_space<vmem>>) attributes {dimension_semantics = [#tpu.dimension_semantics<parallel>], iteration_bounds = array<i64: 1>, scalar_prefetch = 0 : i64, scratch_operands = 1 : i64, tpu.core_type = #tpu.core_type<tc>, window_params = [{transform_indices = @transform_0, window_bounds = array<i64: 16, 8, 32>}, {pipeline_mode = #tpu.pipeline_mode<synchronous>, transform_indices = @transform_1, window_bounds = array<i64: 32, 192>}, {pipeline_mode = #tpu.pipeline_mode<synchronous>, transform_indices = @transform_2, window_bounds = array<i64: 1, 192>}, {pipeline_mode = #tpu.pipeline_mode<synchronous>, transform_indices = @transform_3, window_bounds = array<i64: 64, 192>}, {pipeline_mode = #tpu.pipeline_mode<synchronous>, transform_indices = @transform_4, window_bounds = array<i64: 1, 192>}, {transform_indices = @transform_5, window_bounds = array<i64: 8, 128>}]} {
    %c0 = arith.constant 0 : index
    %c0_0 = arith.constant 0 : index
    %c0_1 = arith.constant 0 : index
    %0 = vector.load %arg1[%c0, %c0_0, %c0_1] : memref<16x8x32xf32, #tpu.memory_space<vmem>>, vector<16x8x32xf32>
    %c0_2 = arith.constant 0 : index
    %c0_3 = arith.constant 0 : index
    %1 = vector.load %arg2[%c0_2, %c0_3] : memref<32x192xf32, #tpu.memory_space<vmem>>, vector<32x192xf32>
    "tpu.trace_start"() <{level = 10 : i32, message = "lnd,dg->lng"}> : () -> ()
    %cst = arith.constant dense<0.000000e+00> : vector<16x8x192xf32>
    %2 = tpu.matmul %0, %1, %cst {dimension_numbers = #tpu.dot_dimension_numbers<[2], [0], [0, 1], [1], [0, 0, 0, 1, 1, 1], [], []>} : vector<16x8x32xf32>, vector<32x192xf32>, vector<16x8x192xf32> -> vector<16x8x192xf32>
    "tpu.trace_stop"() : () -> ()
    %c0_4 = arith.constant 0 : index
    %c0_5 = arith.constant 0 : index
    %3 = vector.load %arg3[%c0_4, %c0_5] : memref<1x192xf32, #tpu.memory_space<vmem>>, vector<1x192xf32>
    %4 = vector.shape_cast %3 : vector<1x192xf32> to vector<1x1x192xf32>
    %5 = vector.broadcast %4 : vector<1x1x192xf32> to vector<16x8x192xf32>
    %6 = arith.addf %2, %5 : vector<16x8x192xf32>
    %c0_6 = arith.constant 0 : index
    %c0_7 = arith.constant 0 : index
    %c0_8 = arith.constant 0 : index
    %7 = vector.load %arg7[%c0_6, %c0_7, %c0_8] : memref<16x8x192xf32, #tpu.memory_space<vmem>>, vector<16x8x192xf32>
    tpu.vector_store %arg7[%c0_6, %c0_7, %c0_8], %6 {strides = array<i32>} : memref<16x8x192xf32, #tpu.memory_space<vmem>>, vector<16x8x192xf32>,
    %c0_9 = arith.constant 0 : index
    %c0_10 = arith.constant 0 : index
    %8 = vector.load %arg4[%c0_9, %c0_10] : memref<64x192xf32, #tpu.memory_space<vmem>>, vector<64x192xf32>
    %c0_11 = arith.constant 0 : index
    %c0_12 = arith.constant 0 : index
    %9 = vector.load %arg5[%c0_11, %c0_12] : memref<1x192xf32, #tpu.memory_space<vmem>>, vector<1x192xf32>
    %cst_13 = arith.constant 0.000000e+00 : f32
    %10 = vector.broadcast %cst_13 : f32 to vector<8x64xf32>
    %c0_i32 = arith.constant 0 : i32
    %c16_i32 = arith.constant 16 : i32
    %11 = arith.addi %c0_i32, %c16_i32 : i32
    %c1_i32 = arith.constant 1 : i32
    %12 = scf.for %arg8 = %c0_i32 to %11 step %c1_i32 iter_args(%arg9 = %10) -> (vector<8x64xf32>)  : i32 {
      %16 = arith.index_cast %arg8 : i32 to index
      %c0_18 = arith.constant 0 : index
      %c0_19 = arith.constant 0 : index
      %17 = vector.load %arg7[%16, %c0_18, %c0_19] : memref<16x8x192xf32, #tpu.memory_space<vmem>>, vector<1x8x192xf32>
      %18 = vector.shape_cast %17 : vector<1x8x192xf32> to vector<8x192xf32>
      %c15_i32 = arith.constant 15 : i32
      %19 = arith.subi %c15_i32, %arg8 : i32
      %20 = arith.index_cast %19 : i32 to index
      %c0_20 = arith.constant 0 : index
      %c0_21 = arith.constant 0 : index
      %21 = vector.load %arg7[%20, %c0_20, %c0_21] : memref<16x8x192xf32, #tpu.memory_space<vmem>>, vector<1x8x192xf32>
      %22 = vector.shape_cast %21 : vector<1x8x192xf32> to vector<8x192xf32>
      %cst_22 = arith.constant dense<0.000000e+00> : vector<8x192xf32>
      %23 = tpu.matmul %arg9, %8, %cst_22 {dimension_numbers = #tpu.dot_dimension_numbers<[1], [0], [0], [1], [0, 0, 1, 1], [], []>} : vector<8x64xf32>, vector<64x192xf32>, vector<8x192xf32> -> vector<8x192xf32>
      %24 = vector.broadcast %9 : vector<1x192xf32> to vector<8x192xf32>
      %25 = arith.addf %23, %24 : vector<8x192xf32>
      %26 = vector.extract_strided_slice %arg9 {offsets = [0, 0], sizes = [8, 32], strides = [1, 1]} : vector<8x64xf32> to vector<8x32xf32>
      %27 = vector.extract_strided_slice %arg9 {offsets = [0, 32], sizes = [8, 32], strides = [1, 1]} : vector<8x64xf32> to vector<8x32xf32>
      %28 = vector.extract_strided_slice %18 {offsets = [0, 0], sizes = [8, 32], strides = [1, 1]} : vector<8x192xf32> to vector<8x32xf32>
      %29 = vector.extract_strided_slice %25 {offsets = [0, 0], sizes = [8, 32], strides = [1, 1]} : vector<8x192xf32> to vector<8x32xf32>
      %30 = arith.addf %28, %29 : vector<8x32xf32>
      %31 = arith.negf %30 : vector<8x32xf32>
      %32 = math.exp %31 : vector<8x32xf32>
      %cst_23 = arith.constant 1.000000e+00 : f32
      %33 = vector.broadcast %cst_23 : f32 to vector<8x32xf32>
      %34 = arith.addf %33, %32 : vector<8x32xf32>
      %35 = arith.divf %33, %34 : vector<8x32xf32>
      %36 = vector.extract_strided_slice %18 {offsets = [0, 32], sizes = [8, 32], strides = [1, 1]} : vector<8x192xf32> to vector<8x32xf32>
      %37 = vector.extract_strided_slice %25 {offsets = [0, 32], sizes = [8, 32], strides = [1, 1]} : vector<8x192xf32> to vector<8x32xf32>
      %38 = arith.addf %36, %37 : vector<8x32xf32>
      %39 = arith.negf %38 : vector<8x32xf32>
      %40 = math.exp %39 : vector<8x32xf32>
      %cst_24 = arith.constant 1.000000e+00 : f32
      %41 = vector.broadcast %cst_24 : f32 to vector<8x32xf32>
      %42 = arith.addf %41, %40 : vector<8x32xf32>
      %43 = arith.divf %41, %42 : vector<8x32xf32>
      %44 = vector.extract_strided_slice %18 {offsets = [0, 64], sizes = [8, 32], strides = [1, 1]} : vector<8x192xf32> to vector<8x32xf32>
      %45 = vector.extract_strided_slice %25 {offsets = [0, 64], sizes = [8, 32], strides = [1, 1]} : vector<8x192xf32> to vector<8x32xf32>
      %46 = arith.mulf %35, %45 : vector<8x32xf32>
      %47 = arith.addf %44, %46 : vector<8x32xf32>
      %48 = math.tanh %47 : vector<8x32xf32>
      %cst_25 = arith.constant 1.000000e+00 : f32
      %49 = vector.broadcast %cst_25 : f32 to vector<8x32xf32>
      %50 = arith.subf %49, %43 : vector<8x32xf32>
      %51 = arith.mulf %50, %48 : vector<8x32xf32>
      %52 = arith.mulf %43, %26 : vector<8x32xf32>
      %53 = arith.addf %51, %52 : vector<8x32xf32>
      %54 = vector.extract_strided_slice %22 {offsets = [0, 96], sizes = [8, 32], strides = [1, 1]} : vector<8x192xf32> to vector<8x32xf32>
      %55 = vector.extract_strided_slice %25 {offsets = [0, 96], sizes = [8, 32], strides = [1, 1]} : vector<8x192xf32> to vector<8x32xf32>
      %56 = arith.addf %54, %55 : vector<8x32xf32>
      %57 = arith.negf %56 : vector<8x32xf32>
      %58 = math.exp %57 : vector<8x32xf32>
      %cst_26 = arith.constant 1.000000e+00 : f32
      %59 = vector.broadcast %cst_26 : f32 to vector<8x32xf32>
      %60 = arith.addf %59, %58 : vector<8x32xf32>
      %61 = arith.divf %59, %60 : vector<8x32xf32>
      %62 = vector.extract_strided_slice %22 {offsets = [0, 128], sizes = [8, 32], strides = [1, 1]} : vector<8x192xf32> to vector<8x32xf32>
      %63 = vector.extract_strided_slice %25 {offsets = [0, 128], sizes = [8, 32], strides = [1, 1]} : vector<8x192xf32> to vector<8x32xf32>
      %64 = arith.addf %62, %63 : vector<8x32xf32>
      %65 = arith.negf %64 : vector<8x32xf32>
      %66 = math.exp %65 : vector<8x32xf32>
      %cst_27 = arith.constant 1.000000e+00 : f32
      %67 = vector.broadcast %cst_27 : f32 to vector<8x32xf32>
      %68 = arith.addf %67, %66 : vector<8x32xf32>
      %69 = arith.divf %67, %68 : vector<8x32xf32>
      %70 = vector.extract_strided_slice %22 {offsets = [0, 160], sizes = [8, 32], strides = [1, 1]} : vector<8x192xf32> to vector<8x32xf32>
      %71 = vector.extract_strided_slice %25 {offsets = [0, 160], sizes = [8, 32], strides = [1, 1]} : vector<8x192xf32> to vector<8x32xf32>
      %72 = arith.mulf %61, %71 : vector<8x32xf32>
      %73 = arith.addf %70, %72 : vector<8x32xf32>
      %74 = math.tanh %73 : vector<8x32xf32>
      %cst_28 = arith.constant 1.000000e+00 : f32
      %75 = vector.broadcast %cst_28 : f32 to vector<8x32xf32>
      %76 = arith.subf %75, %69 : vector<8x32xf32>
      %77 = arith.mulf %76, %74 : vector<8x32xf32>
      %78 = arith.mulf %69, %27 : vector<8x32xf32>
      %79 = arith.addf %77, %78 : vector<8x32xf32>
      %80 = tpu.concatenate %53, %79 in 1 : vector<8x32xf32>, vector<8x32xf32> -> vector<8x64xf32>
      scf.yield %80 : vector<8x64xf32>
    }
    %c16_i32_14 = arith.constant 16 : i32
    %cst_15 = arith.constant 0.000000e+00 : f32
    %13 = vector.broadcast %cst_15 : f32 to vector<8x64xf32>
    %14 = tpu.concatenate %12, %13 in 1 : vector<8x64xf32>, vector<8x64xf32> -> vector<8x128xf32>
    %c0_16 = arith.constant 0 : index
    %c0_17 = arith.constant 0 : index
    %15 = vector.load %arg6[%c0_16, %c0_17] : memref<8x128xf32, #tpu.memory_space<vmem>>, vector<8x128xf32>
    tpu.vector_store %arg6[%c0_16, %c0_17], %14 {strides = array<i32>} : memref<8x128xf32, #tpu.memory_space<vmem>>, vector<8x128xf32>,
    return
  }
  func.func @transform_0(%arg0: i32) -> (i32, i32, i32) {
    %c0_i32 = arith.constant 0 : i32
    %c0_i32_0 = arith.constant 0 : i32
    %c0_i32_1 = arith.constant 0 : i32
    return %c0_i32, %arg0, %c0_i32_0 : i32, i32, i32
  }
  func.func @transform_1(%arg0: i32) -> (i32, i32) {
    %c0_i32 = arith.constant 0 : i32
    %c0_i32_0 = arith.constant 0 : i32
    %c0_i32_1 = arith.constant 0 : i32
    return %c0_i32, %c0_i32_0 : i32, i32
  }
  func.func @transform_2(%arg0: i32) -> (i32, i32) {
    %c0_i32 = arith.constant 0 : i32
    %c0_i32_0 = arith.constant 0 : i32
    %c0_i32_1 = arith.constant 0 : i32
    return %c0_i32, %c0_i32_0 : i32, i32
  }
  func.func @transform_3(%arg0: i32) -> (i32, i32) {
    %c0_i32 = arith.constant 0 : i32
    %c0_i32_0 = arith.constant 0 : i32
    %c0_i32_1 = arith.constant 0 : i32
    return %c0_i32, %c0_i32_0 : i32, i32
  }
  func.func @transform_4(%arg0: i32) -> (i32, i32) {
    %c0_i32 = arith.constant 0 : i32
    %c0_i32_0 = arith.constant 0 : i32
    %c0_i32_1 = arith.constant 0 : i32
    return %c0_i32, %c0_i32_0 : i32, i32
  }
  func.func @transform_5(%arg0: i32) -> (i32, i32) {
    %c0_i32 = arith.constant 0 : i32
    %c0_i32_0 = arith.constant 0 : i32
    return %arg0, %c0_i32 : i32, i32
  }
}

</mosaic_0001>

<llo_original>
// kernel: tpu_custom_call.1
$region0: #{tpu_custom_call.1}
  #allocation0 [shape = 'u32[]', space=smem, size = 0x4, offset = 0x4, fixed_abs, tag = 'smem constant byte address 0x4 - core index']
  #allocation1 [shape = 'u32[144,128]{1,0:T(1,128)}', space=vmem, size = 0x12000, scoped, tag = 'internal scratch']
  #allocation2 [shape = 'f32[16,8,192]{2,1,0:T(8,128)}', space=vmem, size = 0x20000, scoped, tag = 'scratch operand']
  %s0 = inlined_call_operand.hbm [shape: f32[16,8,32], index: 0, kind: input, shape index: {}]
  %s1 = inlined_call_operand.hbm [shape: f32[32,192], index: 1, kind: input, shape index: {}]
  %s2 = inlined_call_operand.vmem [shape: f32[1,192], index: 2, kind: input, shape index: {}]
  %s3 = inlined_call_operand.hbm [shape: f32[64,192], index: 3, kind: input, shape index: {}]
  %s4 = inlined_call_operand.vmem [shape: f32[1,192], index: 4, kind: input, shape index: {}]
  %s5 = inlined_call_operand.hbm [shape: f32[8,128], index: 5, kind: output, shape index: {}]
  %s6 = sld [smem:[#allocation0]]
  $region49: #{tpu_custom_call.1} parent=0
    _
  %s8 = ssub.s32 1, %s6
  %s9 = scalar_select 0, %s8, %s6
  $region1: #{tpu_custom_call.1} parent=0
    #allocation3 [shape = 'u8[65536]{0}', space=vmem, size = 0x10000, scoped, tag = 'input window, operand 0, single buffered']
    #allocation4 [shape = 's32[1]{0}', space=sflag, size = 0x4, scoped, tag = 'scoped memory for tpu_custom_call.1']
    #allocation5 [shape = 's32[1]{0}', space=sflag, size = 0x4, scoped, tag = 'scoped memory for tpu_custom_call.1']
    #allocation6 [shape = 'u8[32768]{0}', space=vmem, size = 0x8000, scoped, tag = 'input window, operand 1, single buffered']
    #allocation7 [shape = 's32[1]{0}', space=sflag, size = 0x4, scoped, tag = 'scoped memory for tpu_custom_call.1']
    #allocation8 [shape = 'u8[65536]{0}', space=vmem, size = 0x10000, scoped, tag = 'input window, operand 3, single buffered']
    #allocation9 [shape = 'u8[4096]{0}', space=vmem, size = 0x1000, scoped, tag = 'output window, operand 0, single buffered']
    %10 = vsyncpa [#allocation4], 0
    %11 = vsyncpa [#allocation7], 0
    %12 = vsyncpa [#allocation5], 0
    // Predicated region
    $region2: #{tpu_custom_call.1} parent=1 // pred_check
      _
    $region3: #{tpu_custom_call.1} parent=1 // pred_check_branch
      %14 = sbr.rel (0) target = $region5
    $region4: #{tpu_custom_call.1} parent=1 // pred_region
      %s16 = ssub.s32 2048, 2048
      %17 = vsyncadd [#allocation4], %s16
      %s18 = sshll.u32 [#allocation3], 4
      %s19 = int_to_ptr.vmem [resolvable:$true] %s18
      %24 = dma.hbm_to_vmem [thread:$0]  %s0, 2048, %s19, [#allocation4], 128, 128, 8
    $region5: #{tpu_custom_call.1} parent=1 // pred_fallthru
      _
    // Predicated region
    $region6: #{tpu_custom_call.1} parent=1 // pred_check
      _
    $region7: #{tpu_custom_call.1} parent=1 // pred_check_branch
      %26 = sbr.rel (0) target = $region9
    $region8: #{tpu_custom_call.1} parent=1 // pred_region
      %s28 = ssub.s32 1024, 1024
      %29 = vsyncadd [#allocation7], %s28
      %s30 = sshll.u32 [#allocation6], 4
      %s31 = int_to_ptr.vmem [resolvable:$true] %s30
      %36 = dma.hbm_to_vmem [thread:$0]  %s1, 1024, %s31, [#allocation7], 256, 256, 16
    $region9: #{tpu_custom_call.1} parent=1 // pred_fallthru
      _
    // Predicated region
    $region10: #{tpu_custom_call.1} parent=1 // pred_check
      _
    $region11: #{tpu_custom_call.1} parent=1 // pred_check_branch
      %38 = sbr.rel (0) target = $region13
    $region12: #{tpu_custom_call.1} parent=1 // pred_region
      _
    $region13: #{tpu_custom_call.1} parent=1 // pred_fallthru
      _
    // Predicated region
    $region14: #{tpu_custom_call.1} parent=1 // pred_check
      _
    $region15: #{tpu_custom_call.1} parent=1 // pred_check_branch
      %40 = sbr.rel (0) target = $region17
    $region16: #{tpu_custom_call.1} parent=1 // pred_region
      %s42 = ssub.s32 2048, 2048
      %43 = vsyncadd [#allocation7], %s42
      %s44 = sshll.u32 [#allocation8], 4
      %s45 = int_to_ptr.vmem [resolvable:$true] %s44
      %50 = dma.hbm_to_vmem [thread:$0]  %s3, 2048, %s45, [#allocation7], 256, 256, 16
    $region17: #{tpu_custom_call.1} parent=1 // pred_fallthru
      _
    // Predicated region
    $region18: #{tpu_custom_call.1} parent=1 // pred_check
      _
    $region19: #{tpu_custom_call.1} parent=1 // pred_check_branch
      %52 = sbr.rel (0) target = $region21
    $region20: #{tpu_custom_call.1} parent=1 // pred_region
      _
    $region21: #{tpu_custom_call.1} parent=1 // pred_fallthru
      _
    // Predicated region
    $region22: #{tpu_custom_call.1} parent=1 // pred_check
      _
    $region23: #{tpu_custom_call.1} parent=1 // pred_check_branch
      %54 = sbr.rel (0) target = $region25
    $region24: #{tpu_custom_call.1} parent=1 // pred_region
      %55 = dma.done [#allocation4], 2048
    $region25: #{tpu_custom_call.1} parent=1 // pred_fallthru
      _
    // Predicated region
    $region26: #{tpu_custom_call.1} parent=1 // pred_check
      _
    $region27: #{tpu_custom_call.1} parent=1 // pred_check_branch
      %57 = sbr.rel (0) target = $region29
    $region28: #{tpu_custom_call.1} parent=1 // pred_region
      %58 = dma.done [#allocation7], 1024
    $region29: #{tpu_custom_call.1} parent=1 // pred_fallthru
      _
    // Predicated region
    $region30: #{tpu_custom_call.1} parent=1 // pred_check
      _
    $region31: #{tpu_custom_call.1} parent=1 // pred_check_branch
      %60 = sbr.rel (0) target = $region33
    $region32: #{tpu_custom_call.1} parent=1 // pred_region
      %61 = dma.done [#allocation7], 2048
    $region33: #{tpu_custom_call.1} parent=1 // pred_fallthru
      _
    %v62 = vld [vmem:[#allocation3] sm:$0xff]
    %v63 = vld [vmem:[#allocation3 + $0x8] sm:$0xff]
    %v64 = vld [vmem:[#allocation3 + $0x10] sm:$0xff]
    %v65 = vld [vmem:[#allocation3 + $0x18] sm:$0xff]
    %v66 = vld [vmem:[#allocation3 + $0x20] sm:$0xff]
    %v67 = vld [vmem:[#allocation3 + $0x28] sm:$0xff]
    %v68 = vld [vmem:[#allocation3 + $0x30] sm:$0xff]
    %v69 = vld [vmem:[#allocation3 + $0x38] sm:$0xff]
    %v70 = vld [vmem:[#allocation3 + $0x40] sm:$0xff]
    %v71 = vld [vmem:[#allocation3 + $0x48] sm:$0xff]
    %v72 = vld [vmem:[#allocation3 + $0x50] sm:$0xff]
    %v73 = vld [vmem:[#allocation3 + $0x58] sm:$0xff]
    %v74 = vld [vmem:[#allocation3 + $0x60] sm:$0xff]
    %v75 = vld [vmem:[#allocation3 + $0x68] sm:$0xff]
    %v76 = vld [vmem:[#allocation3 + $0x70] sm:$0xff]
    %v77 = vld [vmem:[#allocation3 + $0x78] sm:$0xff]
    %v78 = vld [vmem:[#allocation6] sm:$0xff]
    %v79 = vld [vmem:[#allocation6 + $0x8] sm:$0xff]
    %v80 = vld [vmem:[#allocation6 + $0x10] sm:$0xff]
    %v81 = vld [vmem:[#allocation6 + $0x18] sm:$0xff]
    %v82 = vld [vmem:[#allocation6 + $0x20] sm:$0xff]
    %v83 = vld [vmem:[#allocation6 + $0x28] sm:$0xff]
    %v84 = vld [vmem:[#allocation6 + $0x30] sm:$0xff]
    %v85 = vld [vmem:[#allocation6 + $0x38] sm:$0xff]
    %v86 = vld [vmem:[%s2] sm:$0x3]
    %v88 = vlaneseq
    %v89 = vshrl.u32 %v88, 7
    %v90 = vsub.s32 0, %v89
    %v91 = vrot.slane %v86, %v90
    %v92 = vlaneseq
    %v93 = vshrl.u32 %v92, 7
    %v94 = vsub.s32 1, %v93
    %v95 = vrot.slane %v86, %v94
    %vm98 = vcmask 261120
    %v100 = vsel %vm98, %v62, 0
    %v103 = vsel %vm98, %v63, 0
    %v106 = vsel %vm98, %v64, 0
    %v109 = vsel %vm98, %v65, 0
    %v112 = vsel %vm98, %v66, 0
    %v115 = vsel %vm98, %v67, 0
    %v118 = vsel %vm98, %v68, 0
    %v121 = vsel %vm98, %v69, 0
    %v124 = vsel %vm98, %v70, 0
    %v127 = vsel %vm98, %v71, 0
    %v130 = vsel %vm98, %v72, 0
    %v133 = vsel %vm98, %v73, 0
    %v136 = vsel %vm98, %v74, 0
    %v139 = vsel %vm98, %v75, 0
    %v142 = vsel %vm98, %v76, 0
    %v145 = vsel %vm98, %v77, 0
    %147 = vmatprep.subr.mxu0 %v79
    %148 = vmatpush1.msra.mxu0 %v78
    %149 = vmatprep.subr.mxu0 %v81
    %150 = vmatpush1.msra.mxu0 %v80
    %151 = vmatprep.subr.mxu0 %v83
    %152 = vmatpush1.msra.mxu0 %v82
    %153 = vmatprep.subr.mxu0 %v85
    %154 = vmatpush1.msra.mxu0 %v84
    %155 = vmatprep.subr.mxu0 0.0
    %156 = vmatpush1.msra.mxu0 0.0
    %157 = vmatprep.subr.mxu0 0.0
    %158 = vmatpush1.msra.mxu0 0.0
    %159 = vmatprep.subr.mxu0 0.0
    %160 = vmatpush1.msra.mxu0 0.0
    %161 = vmatprep.subr.mxu0 0.0
    %162 = vmatpush1.msra.mxu0 0.0
    %163 = vmatprep.subr.mxu0 0.0
    %164 = vmatpush1.msra.mxu0 0.0
    %165 = vmatprep.subr.mxu0 0.0
    %166 = vmatpush1.msra.mxu0 0.0
    %167 = vmatprep.subr.mxu0 0.0
    %168 = vmatpush1.msra.mxu0 0.0
    %169 = vmatprep.subr.mxu0 0.0
    %170 = vmatpush1.msra.mxu0 0.0
    %171 = vmatprep.subr.mxu0 0.0
    %172 = vmatpush1.msra.mxu0 0.0
    %173 = vmatprep.subr.mxu0 0.0
    %174 = vmatpush1.msra.mxu0 0.0
    %175 = vmatprep.subr.mxu0 0.0
    %176 = vmatpush1.msra.mxu0 0.0
    %177 = vmatprep.subr.mxu0 0.0
    %178 = vmatpush1.msra.mxu0 0.0
    %179 = vmatprep.subr.mxu0 0.0
    %180 = vmatpush1.msra.mxu0 0.0
    %181 = vmatprep.subr.mxu0 0.0
    %182 = vmatpush1.msra.mxu0 0.0
    %183 = vmatprep.subr.mxu0 0.0
    %184 = vmatpush1.msra.mxu0 0.0
    %185 = vmatprep.subr.mxu0 0.0
    %186 = vmatpush1.msra.mxu0 0.0
    %187 = vmatprep.subr.mxu0 0.0
    %188 = vmatpush1.msra.mxu0 0.0
    %189 = vmatprep.subr.mxu0 0.0
    %190 = vmatpush1.msra.mxu0 0.0
    %191 = vmatprep.subr.mxu0 0.0
    %192 = vmatpush1.msra.mxu0 0.0
    %193 = vmatprep.subr.mxu0 0.0
    %194 = vmatpush1.msra.mxu0 0.0
    %195 = vmatprep.subr.mxu0 0.0
    %196 = vmatpush1.msra.mxu0 0.0
    %197 = vmatprep.subr.mxu0 0.0
    %198 = vmatpush1.msra.mxu0 0.0
    %199 = vmatprep.subr.mxu0 0.0
    %200 = vmatpush1.msra.mxu0 0.0
    %201 = vmatprep.subr.mxu0 0.0
    %202 = vmatpush1.msra.mxu0 0.0
    %203 = vmatprep.subr.mxu0 0.0
    %204 = vmatpush1.msra.mxu0 0.0
    %205 = vmatprep.subr.mxu0 0.0
    %206 = vmatpush1.msra.mxu0 0.0
    %207 = vmatprep.subr.mxu0 0.0
    %208 = vmatpush1.msra.mxu0 0.0
    %209 = vmatprep.subr.mxu0 0.0
    %210 = vmatpush1.msra.mxu0 0.0
    %211 = vmatprep.mubr.f32.mxu0 0.0
    %212 = vmatmul.mubr.f32.gmra.mrb[0].mxu0 %v100
    %v213 = vpop.f32.mrb[0].mxu0
    %v214 = vadd.f32 %v91, %v213
    %v215 = vpop.f32.mrb[0].mxu0
    %v216 = vadd.f32 %v95, %v215
    %217 = vmatprep.mubr.f32.mxu0 0.0
    %218 = vmatmul.mubr.f32.gmra.mrb[0].mxu0 %v103
    %v219 = vpop.f32.mrb[0].mxu0
    %v220 = vadd.f32 %v91, %v219
    %v221 = vpop.f32.mrb[0].mxu0
    %v222 = vadd.f32 %v95, %v221
    %223 = vmatprep.mubr.f32.mxu0 0.0
    %224 = vmatmul.mubr.f32.gmra.mrb[0].mxu0 %v106
    %v225 = vpop.f32.mrb[0].mxu0
    %v226 = vadd.f32 %v91, %v225
    %v227 = vpop.f32.mrb[0].mxu0
    %v228 = vadd.f32 %v95, %v227
    %229 = vmatprep.mubr.f32.mxu0 0.0
    %230 = vmatmul.mubr.f32.gmra.mrb[0].mxu0 %v109
    %v231 = vpop.f32.mrb[0].mxu0
    %v232 = vadd.f32 %v91, %v231
    %v233 = vpop.f32.mrb[0].mxu0
    %v234 = vadd.f32 %v95, %v233
    %235 = vmatprep.mubr.f32.mxu0 0.0
    %236 = vmatmul.mubr.f32.gmra.mrb[0].mxu0 %v112
    %v237 = vpop.f32.mrb[0].mxu0
    %v238 = vadd.f32 %v91, %v237
    %v239 = vpop.f32.mrb[0].mxu0
    %v240 = vadd.f32 %v95, %v239
    %241 = vmatprep.mubr.f32.mxu0 0.0
    %242 = vmatmul.mubr.f32.gmra.mrb[0].mxu0 %v115
    %v243 = vpop.f32.mrb[0].mxu0
    %v244 = vadd.f32 %v91, %v243
    %v245 = vpop.f32.mrb[0].mxu0
    %v246 = vadd.f32 %v95, %v245
    %247 = vmatprep.mubr.f32.mxu0 0.0
    %248 = vmatmul.mubr.f32.gmra.mrb[0].mxu0 %v118
    %v249 = vpop.f32.mrb[0].mxu0
    %v250 = vadd.f32 %v91, %v249
    %v251 = vpop.f32.mrb[0].mxu0
    %v252 = vadd.f32 %v95, %v251
    %253 = vmatprep.mubr.f32.mxu0 0.0
    %254 = vmatmul.mubr.f32.gmra.mrb[0].mxu0 %v121
    %v255 = vpop.f32.mrb[0].mxu0
    %v256 = vadd.f32 %v91, %v255
    %v257 = vpop.f32.mrb[0].mxu0
    %v258 = vadd.f32 %v95, %v257
    %259 = vmatprep.mubr.f32.mxu0 0.0
    %260 = vmatmul.mubr.f32.gmra.mrb[0].mxu0 %v124
    %v261 = vpop.f32.mrb[0].mxu0
    %v262 = vadd.f32 %v91, %v261
    %v263 = vpop.f32.mrb[0].mxu0
    %v264 = vadd.f32 %v95, %v263
    %265 = vmatprep.mubr.f32.mxu0 0.0
    %266 = vmatmul.mubr.f32.gmra.mrb[0].mxu0 %v127
    %v267 = vpop.f32.mrb[0].mxu0
    %v268 = vadd.f32 %v91, %v267
    %v269 = vpop.f32.mrb[0].mxu0
    %v270 = vadd.f32 %v95, %v269
    %271 = vmatprep.mubr.f32.mxu0 0.0
    %272 = vmatmul.mubr.f32.gmra.mrb[0].mxu0 %v130
    %v273 = vpop.f32.mrb[0].mxu0
    %v274 = vadd.f32 %v91, %v273
    %v275 = vpop.f32.mrb[0].mxu0
    %v276 = vadd.f32 %v95, %v275
    %277 = vmatprep.mubr.f32.mxu0 0.0
    %278 = vmatmul.mubr.f32.gmra.mrb[0].mxu0 %v133
    %v279 = vpop.f32.mrb[0].mxu0
    %v280 = vadd.f32 %v91, %v279
    %v281 = vpop.f32.mrb[0].mxu0
    %v282 = vadd.f32 %v95, %v281
    %283 = vmatprep.mubr.f32.mxu0 0.0
    %284 = vmatmul.mubr.f32.gmra.mrb[0].mxu0 %v136
    %v285 = vpop.f32.mrb[0].mxu0
    %v286 = vadd.f32 %v91, %v285
    %v287 = vpop.f32.mrb[0].mxu0
    %v288 = vadd.f32 %v95, %v287
    %289 = vmatprep.mubr.f32.mxu0 0.0
    %290 = vmatmul.mubr.f32.gmra.mrb[0].mxu0 %v139
    %v291 = vpop.f32.mrb[0].mxu0
    %v292 = vadd.f32 %v91, %v291
    %v293 = vpop.f32.mrb[0].mxu0
    %v294 = vadd.f32 %v95, %v293
    %295 = vmatprep.mubr.f32.mxu0 0.0
    %296 = vmatmul.mubr.f32.gmra.mrb[0].mxu0 %v142
    %v297 = vpop.f32.mrb[0].mxu0
    %v298 = vadd.f32 %v91, %v297
    %v299 = vpop.f32.mrb[0].mxu0
    %v300 = vadd.f32 %v95, %v299
    %301 = vmatprep.mubr.f32.mxu0 0.0
    %302 = vmatmul.mubr.f32.gmra.mrb[0].mxu0 %v145
    %v303 = vpop.f32.mrb[0].mxu0
    %v304 = vadd.f32 %v91, %v303
    %v305 = vpop.f32.mrb[0].mxu0
    %v306 = vadd.f32 %v95, %v305
    %307 = vdwg.mxu0
    %308 = vst [vmem:[#allocation2] sm:$0xff] %v214
    %vm309 = vcmask 523264
    %310 = vst.msk [vmem:[#allocation2 + $0x8] sm:$0xff] %vm309, %v216
    %311 = vst [vmem:[#allocation2 + $0x10] sm:$0xff] %v220
    %312 = vst.msk [vmem:[#allocation2 + $0x18] sm:$0xff] %vm309, %v222
    %313 = vst [vmem:[#allocation2 + $0x20] sm:$0xff] %v226
    %314 = vst.msk [vmem:[#allocation2 + $0x28] sm:$0xff] %vm309, %v228
    %315 = vst [vmem:[#allocation2 + $0x30] sm:$0xff] %v232
    %316 = vst.msk [vmem:[#allocation2 + $0x38] sm:$0xff] %vm309, %v234
    %317 = vst [vmem:[#allocation2 + $0x40] sm:$0xff] %v238
    %318 = vst.msk [vmem:[#allocation2 + $0x48] sm:$0xff] %vm309, %v240
    %319 = vst [vmem:[#allocation2 + $0x50] sm:$0xff] %v244
    %320 = vst.msk [vmem:[#allocation2 + $0x58] sm:$0xff] %vm309, %v246
    %321 = vst [vmem:[#allocation2 + $0x60] sm:$0xff] %v250
    %322 = vst.msk [vmem:[#allocation2 + $0x68] sm:$0xff] %vm309, %v252
    %323 = vst [vmem:[#allocation2 + $0x70] sm:$0xff] %v256
    %324 = vst.msk [vmem:[#allocation2 + $0x78] sm:$0xff] %vm309, %v258
    %325 = vst [vmem:[#allocation2 + $0x80] sm:$0xff] %v262
    %326 = vst.msk [vmem:[#allocation2 + $0x88] sm:$0xff] %vm309, %v264
    %327 = vst [vmem:[#allocation2 + $0x90] sm:$0xff] %v268
    %328 = vst.msk [vmem:[#allocation2 + $0x98] sm:$0xff] %vm309, %v270
    %329 = vst [vmem:[#allocation2 + $0xa0] sm:$0xff] %v274
    %330 = vst.msk [vmem:[#allocation2 + $0xa8] sm:$0xff] %vm309, %v276
    %331 = vst [vmem:[#allocation2 + $0xb0] sm:$0xff] %v280
    %332 = vst.msk [vmem:[#allocation2 + $0xb8] sm:$0xff] %vm309, %v282
    %333 = vst [vmem:[#allocation2 + $0xc0] sm:$0xff] %v286
    %334 = vst.msk [vmem:[#allocation2 + $0xc8] sm:$0xff] %vm309, %v288
    %335 = vst [vmem:[#allocation2 + $0xd0] sm:$0xff] %v292
    %336 = vst.msk [vmem:[#allocation2 + $0xd8] sm:$0xff] %vm309, %v294
    %337 = vst [vmem:[#allocation2 + $0xe0] sm:$0xff] %v298
    %338 = vst.msk [vmem:[#allocation2 + $0xe8] sm:$0xff] %vm309, %v300
    %339 = vst [vmem:[#allocation2 + $0xf0] sm:$0xff] %v304
    %340 = vst.msk [vmem:[#allocation2 + $0xf8] sm:$0xff] %vm309, %v306
    %v341 = vld [vmem:[#allocation8] sm:$0xff]
    %v342 = vld [vmem:[#allocation8 + $0x8] sm:$0xff]
    %v343 = vld [vmem:[#allocation8 + $0x10] sm:$0xff]
    %v344 = vld [vmem:[#allocation8 + $0x18] sm:$0xff]
    %v345 = vld [vmem:[#allocation8 + $0x20] sm:$0xff]
    %v346 = vld [vmem:[#allocation8 + $0x28] sm:$0xff]
    %v347 = vld [vmem:[#allocation8 + $0x30] sm:$0xff]
    %v348 = vld [vmem:[#allocation8 + $0x38] sm:$0xff]
    %v349 = vld [vmem:[#allocation8 + $0x40] sm:$0xff]
    %v350 = vld [vmem:[#allocation8 + $0x48] sm:$0xff]
    %v351 = vld [vmem:[#allocation8 + $0x50] sm:$0xff]
    %v352 = vld [vmem:[#allocation8 + $0x58] sm:$0xff]
    %v353 = vld [vmem:[#allocation8 + $0x60] sm:$0xff]
    %v354 = vld [vmem:[#allocation8 + $0x68] sm:$0xff]
    %v355 = vld [vmem:[#allocation8 + $0x70] sm:$0xff]
    %v356 = vld [vmem:[#allocation8 + $0x78] sm:$0xff]
    %v357 = vld [vmem:[%s4] sm:$0x3]
    loop: start=0, step=1, limit=16
    $region34: #{tpu_custom_call.1} parent=1 // loop_pre_header
      _
    $region35: #{tpu_custom_call.1} parent=1 // loop_header
      %s359 = sphi 0, %s363
      %p360 = scmp.ge.s32.totalorder %s359, 16
      %v364 = vphi 0.0, %v533
    $region36: #{tpu_custom_call.1} parent=1 // loop_header_branch
      %362 = sbr.rel (%p360) target = $region40
    $region37: #{tpu_custom_call.1} parent=1 // loop_body
      %s365 = smul.u32 %s359, 2
      %s366 = smul.addr %s365, 8
      %s367 = scalar_lea.vmem [#allocation2], %s366
      %v368 = vld [vmem:[%s367] sm:$0xff]
      %s369 = ssub.s32 15, %s359
      %s370 = smul.u32 %s369, 2
      %s371 = smul.addr %s370, 8
      %s372 = scalar_lea.vmem [#allocation2], %s371
      %v373 = vld [vmem:[%s372] sm:$0xff]
      %v374 = vld [vmem:[%s372 + $0x8] sm:$0xff]
      %v376 = vlaneseq
      %v377 = vshrl.u32 %v376, 7
      %v378 = vsub.s32 0, %v377
      %v379 = vrot.slane %v357, %v378
      %v380 = vlaneseq
      %v381 = vshrl.u32 %v380, 7
      %v382 = vsub.s32 1, %v381
      %v383 = vrot.slane %v357, %v382
      %v387 = vsel %vm309, %v364, 0
      %389 = vmatprep.subr.mxu0 %v342
      %390 = vmatpush1.msra.mxu0 %v341
      %391 = vmatprep.subr.mxu0 %v344
      %392 = vmatpush1.msra.mxu0 %v343
      %393 = vmatprep.subr.mxu0 %v346
      %394 = vmatpush1.msra.mxu0 %v345
      %395 = vmatprep.subr.mxu0 %v348
      %396 = vmatpush1.msra.mxu0 %v347
      %397 = vmatprep.subr.mxu0 %v350
      %398 = vmatpush1.msra.mxu0 %v349
      %399 = vmatprep.subr.mxu0 %v352
      %400 = vmatpush1.msra.mxu0 %v351
      %401 = vmatprep.subr.mxu0 %v354
      %402 = vmatpush1.msra.mxu0 %v353
      %403 = vmatprep.subr.mxu0 %v356
      %404 = vmatpush1.msra.mxu0 %v355
      %405 = vmatprep.subr.mxu0 0.0
      %406 = vmatpush1.msra.mxu0 0.0
      %407 = vmatprep.subr.mxu0 0.0
      %408 = vmatpush1.msra.mxu0 0.0
      %409 = vmatprep.subr.mxu0 0.0
      %410 = vmatpush1.msra.mxu0 0.0
      %411 = vmatprep.subr.mxu0 0.0
      %412 = vmatpush1.msra.mxu0 0.0
      %413 = vmatprep.subr.mxu0 0.0
      %414 = vmatpush1.msra.mxu0 0.0
      %415 = vmatprep.subr.mxu0 0.0
      %416 = vmatpush1.msra.mxu0 0.0
      %417 = vmatprep.subr.mxu0 0.0
      %418 = vmatpush1.msra.mxu0 0.0
      %419 = vmatprep.subr.mxu0 0.0
      %420 = vmatpush1.msra.mxu0 0.0
      %421 = vmatprep.subr.mxu0 0.0
      %422 = vmatpush1.msra.mxu0 0.0
      %423 = vmatprep.subr.mxu0 0.0
      %424 = vmatpush1.msra.mxu0 0.0
      %425 = vmatprep.subr.mxu0 0.0
      %426 = vmatpush1.msra.mxu0 0.0
      %427 = vmatprep.subr.mxu0 0.0
      %428 = vmatpush1.msra.mxu0 0.0
      %429 = vmatprep.subr.mxu0 0.0
      %430 = vmatpush1.msra.mxu0 0.0
      %431 = vmatprep.subr.mxu0 0.0
      %432 = vmatpush1.msra.mxu0 0.0
      %433 = vmatprep.subr.mxu0 0.0
      %434 = vmatpush1.msra.mxu0 0.0
      %435 = vmatprep.subr.mxu0 0.0
      %436 = vmatpush1.msra.mxu0 0.0
      %437 = vmatprep.subr.mxu0 0.0
      %438 = vmatpush1.msra.mxu0 0.0
      %439 = vmatprep.subr.mxu0 0.0
      %440 = vmatpush1.msra.mxu0 0.0
      %441 = vmatprep.subr.mxu0 0.0
      %442 = vmatpush1.msra.mxu0 0.0
      %443 = vmatprep.subr.mxu0 0.0
      %444 = vmatpush1.msra.mxu0 0.0
      %445 = vmatprep.subr.mxu0 0.0
      %446 = vmatpush1.msra.mxu0 0.0
      %447 = vmatprep.subr.mxu0 0.0
      %448 = vmatpush1.msra.mxu0 0.0
      %449 = vmatprep.subr.mxu0 0.0
      %450 = vmatpush1.msra.mxu0 0.0
      %451 = vmatprep.subr.mxu0 0.0
      %452 = vmatpush1.msra.mxu0 0.0
      %453 = vmatprep.mubr.f32.mxu0 0.0
      %454 = vmatmul.mubr.f32.gmra.mrb[0].mxu0 %v387
      %v455 = vpop.f32.mrb[0].mxu0
      %v456 = vadd.f32 %v379, %v455
      %v457 = vpop.f32.mrb[0].mxu0
      %v458 = vadd.f32 %v383, %v457
      %459 = vdwg.mxu0
      %v460 = vadd.f32 %v368, %v456
      %v461 = vxor.u32 %v460, 2147483648
      %v462 = vmul.f32 %v461, 1.442695
      %v463 = vpow.pop %v462
      %v464 = vadd.f32 %v463, 1.0
      %v465 = vrcp.pop %v464
      %v466 = vmul.f32 1.0, %v465
      %468 = vrot.lane.b32.xlu0 %v456, 64
      %v469 = vpop.permute.xlu0 %468
      %v471 = vmul.f32 %v466, %v469
      %473 = vrot.lane.b32.xlu0 %v471, 64
      %v474 = vpop.permute.xlu0 %473
      %v476 = vadd.f32 %v368, %v474
      %v477 = vtanh.pop %v476
      %v478 = vsub.f32 1.0, %v466
      %480 = vrot.lane.b32.xlu0 %v477, 96
      %v481 = vpop.permute.xlu0 %480
      %v483 = vmul.f32 %v478, %v481
      %484 = vrot.lane.b32.xlu0 %v364, 32
      %v485 = vpop.permute.xlu0 %484
      %v487 = vmul.f32 %v466, %v485
      %v488 = vadd.f32 %v483, %v487
      %v489 = vadd.f32 %v373, %v456
      %v490 = vxor.u32 %v489, 2147483648
      %v491 = vmul.f32 %v490, 1.442695
      %v492 = vpow.pop %v491
      %v493 = vadd.f32 %v492, 1.0
      %v494 = vrcp.pop %v493
      %v495 = vmul.f32 1.0, %v494
      %v496 = vadd.f32 %v374, %v458
      %v497 = vxor.u32 %v496, 2147483648
      %v498 = vmul.f32 %v497, 1.442695
      %v499 = vpow.pop %v498
      %v500 = vadd.f32 %v499, 1.0
      %v501 = vrcp.pop %v500
      %v502 = vmul.f32 1.0, %v501
      %504 = vrot.lane.b32.xlu0 %v458, 64
      %v505 = vpop.permute.xlu0 %504
      %v507 = vmul.f32 %v495, %v505
      %509 = vrot.lane.b32.xlu0 %v507, 64
      %v510 = vpop.permute.xlu0 %509
      %v512 = vadd.f32 %v374, %v510
      %v513 = vtanh.pop %v512
      %v514 = vsub.f32 1.0, %v502
      %516 = vrot.lane.b32.xlu0 %v513, 96
      %v517 = vpop.permute.xlu0 %516
      %v519 = vmul.f32 %v514, %v517
      %520 = vrot.lane.b32.xlu0 %v364, 96
      %v521 = vpop.permute.xlu0 %520
      %v523 = vmul.f32 %v502, %v521
      %v524 = vadd.f32 %v519, %v523
      %526 = vrot.lane.b32.xlu0 %v488, 96
      %v527 = vpop.permute.xlu0 %526
      %530 = vrot.lane.b32.xlu0 %v524, 32
      %v531 = vpop.permute.xlu0 %530
      %v533 = vsel %vm98, %v527, %v531
    $region38: #{tpu_custom_call.1} parent=1 // loop_footer
      %s363 = sadd.s32 1, %s359
    $region39: #{tpu_custom_call.1} parent=1 // loop_footer_branch
      %358 = sbr.rel target = $region35
    $region40: #{tpu_custom_call.1} parent=1 // loop_exit
      _
    %v534 = vsel %vm309, %v364, 0.0
    %535 = vst [vmem:[#allocation9] sm:$0xff] %v534
    // Predicated region
    $region41: #{tpu_custom_call.1} parent=1 // pred_check
      _
    $region42: #{tpu_custom_call.1} parent=1 // pred_check_branch
      %537 = sbr.rel (0) target = $region44
    $region43: #{tpu_custom_call.1} parent=1 // pred_region
      %s539 = ssub.s32 128, 128
      %540 = vsyncadd [#allocation5], %s539
      %s542 = sshll.u32 [#allocation9], 4
      %s543 = int_to_ptr.vmem [resolvable:$true] %s542
      %545 = dma.vmem_to_hbm [thread:$0]  %s543, 128, %s5, [#allocation5]
    $region44: #{tpu_custom_call.1} parent=1 // pred_fallthru
      _
    // Predicated region
    $region45: #{tpu_custom_call.1} parent=1 // pred_check
      _
    $region46: #{tpu_custom_call.1} parent=1 // pred_check_branch
      %547 = sbr.rel (0) target = $region48
    $region47: #{tpu_custom_call.1} parent=1 // pred_region
      %548 = dma.done [#allocation5], 128
    $region48: #{tpu_custom_call.1} parent=1 // pred_fallthru
      _
    %549 = vsyncpa [#allocation4], 1
    %550 = vsyncpa [#allocation7], 1
    %551 = vsyncpa [#allocation5], 1

</llo_original>
